<compile_context>
chip_gen: v7x
topology: tpu7x:2x2x1
jax: 0.10.0
libtpu: 0.0.40
codegen_flags: <defaults>
</compile_context>

<pallas_src>
import jax
import jax.numpy as jnp
from jax.experimental import pallas as pl
from jax.experimental.pallas import tpu as pltpu


# --------------------------------------------------------------------------- #
# helpers
# --------------------------------------------------------------------------- #
def _round_down(a: int, b: int) -> int:
    return (a // b) * b


def _neutral_min(dtype):
    """Python-scalar identity element for max in the given dtype."""
    if jnp.issubdtype(dtype, jnp.floating):
        return float("-inf")
    if jnp.issubdtype(dtype, jnp.integer):
        return int(jnp.iinfo(dtype).min)
    return False  # bool


def _sublane_pack(dtype) -> int:
    """Native sublane packing: 8 rows for 32-bit, 16 for 16-bit, 32 for 8-bit."""
    return {4: 8, 2: 16, 1: 32}.get(jnp.dtype(dtype).itemsize, 8)


def _tpu_tuning():
    """Returns (target_tile_bytes, max_tile_bytes, vmem_limit_bytes, is_v7)."""
    kind = ""
    try:
        kind = jax.devices()[0].device_kind.lower()
    except Exception:
        pass
    if "v7" in kind:
        # 3.2 TB/s HBM: big tiles to amortize per-step overhead; 2x16 MiB
        # double-buffered input + tiny output fits the 64 MiB physical VMEM.
        return 12 << 20, 16 << 20, 48 << 20, True
    if "v6" in kind:
        return 8 << 20, 8 << 20, 48 << 20, False
    # v5e / unknown: stay modest (scoped default is 16 MiB, physical 128 MiB).
    return 4 << 20, 4 << 20, 24 << 20, False


# --------------------------------------------------------------------------- #
# kernels
# --------------------------------------------------------------------------- #
def _make_seg_kernel(tS: int, S: int, neutral, mask_tail: bool):
    """General path: (TB, tS, C) input tile, (TB, C) output-resident accumulator."""

    def kernel(x_ref, o_ref):
        k = pl.program_id(1)
        x = x_ref[...]                                        # (TB, tS, C)
        if mask_tail:
            # Ragged S tail: out-of-range segment rows read unspecified data;
            # neutralize them so they can never win the max.
            seg = jax.lax.broadcasted_iota(jnp.int32, x.shape, 1)
            x = jnp.where(k * tS + seg < S, x, jnp.asarray(neutral, x.dtype))
        blk = jnp.max(x, axis=1)                              # (TB, C)

        @pl.when(k == 0)
        def _init():
            o_ref[...] = blk

        @pl.when(k > 0)
        def _accum():
            o_ref[...] = jnp.maximum(o_ref[...], blk)

    return kernel


def _make_flat_kernel(S: int, C: int):
    """Small-C fast path: (TB, S*C) lane-dense tile, unrolled max over segments."""

    def kernel(x_ref, o_ref):
        v = x_ref[...]                                        # (TB, S*C)
        acc = v[:, 0:C]
        for s in range(1, S):                                 # S is small; VPU work
            acc = jnp.maximum(acc, v[:, s * C:(s + 1) * C])   # hidden under DMA
        o_ref[...] = acc

    return kernel


# --------------------------------------------------------------------------- #
# wrapper
# --------------------------------------------------------------------------- #
def max_consensus(x: jax.Array, *, dim: int = 1,
                  target_tile_bytes: int | None = None,
                  max_tile_bytes: int | None = None) -> jax.Array:
    """Max over `dim` with keepdim (MaxConsensus.forward), Pallas TPU kernel.

    Optimized for the consensus-head layout [N, S, C] with dim=1.
    """
    if x.ndim != 3 or dim != 1:
        # TODO(synk): generic-dim / generic-rank variant; the consensus head
        # always calls this with [N, num_segments, C] and dim=1.
        return jnp.max(x, axis=dim, keepdims=True)

    N, S, C = x.shape
    dtype = x.dtype
    itemsize = jnp.dtype(dtype).itemsize
    pack = _sublane_pack(dtype)

    tgt_d, max_d, vmem_limit, is_v7 = _tpu_tuning()
    target = tgt_d if target_tile_bytes is None else target_tile_bytes
    max_bytes = max_d if max_tile_bytes is None else max_tile_bytes

    if S == 1:
        return x  # max over a single segment is the identity

    out_struct = jax.ShapeDtypeStruct((N, C), dtype)
    cost = pl.CostEstimate(flops=0, transcendentals=0,
                           bytes_accessed=(N * S * C + N * C) * itemsize)

    def _semantics(n_batch_blocks, extra=()):
        if is_v7 and n_batch_blocks >= 2:
            return (pltpu.CORE_PARALLEL,) + tuple(extra)
        return (pltpu.PARALLEL,) + tuple(extra)

    # ---------------- small-C fast path: flatten (S, C) into lanes ----------
    if C < 128 and pack * S * C * itemsize <= max_bytes:
        x_flat = x.reshape(N, S * C)            # contiguous: free metadata reshape
        row_bytes = S * C * itemsize
        TB = max(pack, _round_down(target // row_bytes, pack))
        if TB >= N:
            TB = N                               # full-dim exception on sublanes
        grid = (pl.cdiv(N, TB),)
        # TODO(synk): on v7x, sweep pipeline_mode=pl.Buffered(3) on the input spec.
        y = pl.pallas_call(
            _make_flat_kernel(S, C),
            out_shape=out_struct,
            grid_spec=pltpu.PrefetchScalarGridSpec(
                num_scalar_prefetch=0,
                grid=grid,
                in_specs=[pl.BlockSpec((TB, S * C), lambda n: (n, 0))],
                out_specs=pl.BlockSpec((TB, C), lambda n: (n, 0)),
            ),
            compiler_params=pltpu.CompilerParams(
                dimension_semantics=_semantics(grid[0]),
                vmem_limit_bytes=vmem_limit,
            ),
            cost_estimate=cost,
        )(x_flat)
        return y.reshape(N, 1, C)

    # ---------------- general path: (TB, tS, C) tiles, reduce axis last -----
    row_bytes = C * itemsize
    TB_min = min(pack, N)
    tS_min = min(pack, S)
    if TB_min * tS_min * row_bytes > max_bytes:
        # TODO(synk): channel-axis tiling for extremely large C; rare for this head.
        return jnp.max(x, axis=1, keepdims=True)

    if TB_min * S * row_bytes <= max_bytes:
        tS = S                                   # full reduction axis in one tile
    else:
        tS = max(pack, _round_down(max_bytes // (TB_min * row_bytes), pack))
        tS = min(tS, S)
    mask_tail = (tS < S) and (S % tS != 0)

    TB = max(pack, _round_down(target // (tS * row_bytes), pack))
    if TB >= N:
        TB = N                                   # full-dim exception on sublanes

    grid = (pl.cdiv(N, TB), pl.cdiv(S, tS))
    y = pl.pallas_call(
        _make_seg_kernel(tS, S, _neutral_min(dtype), mask_tail),
        out_shape=out_struct,
        grid_spec=pltpu.PrefetchScalarGridSpec(
            num_scalar_prefetch=0,
            grid=grid,
            in_specs=[pl.BlockSpec((TB, tS, C), lambda n, k: (n, k, 0))],
            out_specs=pl.BlockSpec((TB, C), lambda n, k: (n, 0)),
        ),
        compiler_params=pltpu.CompilerParams(
            dimension_semantics=_semantics(grid[0], (pltpu.ARBITRARY,)),
            vmem_limit_bytes=vmem_limit,
        ),
        cost_estimate=cost,
    )(x)
    return y.reshape(N, 1, C)


# --------------------------------------------------------------------------- #
# self-test
# --------------------------------------------------------------------------- #
if __name__ == "__main__":
    # 1) Typical consensus-head input (small-C fast path): batch=2, segs=8, C=32.
    x = jax.random.normal(jax.random.PRNGKey(0), (2, 8, 32), dtype=jnp.float32)
    y = max_consensus(x)
    jax.block_until_ready(y)
    y_ref = jnp.max(x, axis=1, keepdims=True)
    assert y.shape == (2, 1, 32), y.shape
    assert y.dtype == x.dtype
    assert jnp.array_equal(y, y_ref), "mismatch vs reference (fast path)"

    # 2) General path (C >= 128), no padding anywhere, ragged-friendly shapes.
    x2 = jax.random.normal(jax.random.PRNGKey(1), (5, 6, 200), dtype=jnp.float32)
    y2 = max_consensus(x2)
    jax.block_until_ready(y2)
    assert y2.shape == (5, 1, 200), y2.shape
    assert jnp.array_equal(y2, jnp.max(x2, axis=1, keepdims=True)), \
        "mismatch vs reference (general path)"

    # 3) Force segment tiling with a ragged S tail (in-kernel neutral mask) and
    #    a ragged N edge by shrinking the tile budget.
    x3 = jax.random.normal(jax.random.PRNGKey(2), (10, 20, 256), dtype=jnp.float32)
    y3 = max_consensus(x3, target_tile_bytes=128 * 1024, max_tile_bytes=128 * 1024)
    jax.block_until_ready(y3)
    assert jnp.array_equal(y3, jnp.max(x3, axis=1, keepdims=True)), \
        "mismatch vs reference (tiled-S + masked tail)"

    # 4) bf16 through the fast path (dtype-aware sublane packing).
    x4 = jax.random.normal(jax.random.PRNGKey(3), (3, 4, 64), dtype=jnp.bfloat16)
    y4 = max_consensus(x4)
    jax.block_until_ready(y4)
    assert y4.dtype == jnp.bfloat16
    assert jnp.array_equal(y4, jnp.max(x4, axis=1, keepdims=True)), \
        "mismatch vs reference (bf16)"

    print("KERNEL_OK")
</pallas_src>

<mosaic_0001>
module attributes {stable_mosaic.version = 11 : i64} {
  func.func @kernel(%arg0: i32, %arg1: memref<2x256xf32, #tpu.memory_space<vmem>>, %arg2: memref<2x32xf32, #tpu.memory_space<vmem>>) attributes {dimension_semantics = [#tpu.dimension_semantics<parallel>], iteration_bounds = array<i64: 1>, scalar_prefetch = 0 : i64, scratch_operands = 0 : i64, tpu.core_type = #tpu.core_type<tc>, window_params = [{transform_indices = @transform_0, window_bounds = array<i64: 2, 256>}, {transform_indices = @transform_1, window_bounds = array<i64: 2, 32>}]} {
    %c0 = arith.constant 0 : index
    %c0_0 = arith.constant 0 : index
    %0 = vector.load %arg1[%c0, %c0_0] : memref<2x256xf32, #tpu.memory_space<vmem>>, vector<2x256xf32>
    %1 = vector.extract_strided_slice %0 {offsets = [0, 0], sizes = [2, 32], strides = [1, 1]} : vector<2x256xf32> to vector<2x32xf32>
    %2 = vector.extract_strided_slice %0 {offsets = [0, 32], sizes = [2, 32], strides = [1, 1]} : vector<2x256xf32> to vector<2x32xf32>
    %3 = arith.maximumf %1, %2 : vector<2x32xf32>
    %4 = vector.extract_strided_slice %0 {offsets = [0, 64], sizes = [2, 32], strides = [1, 1]} : vector<2x256xf32> to vector<2x32xf32>
    %5 = arith.maximumf %3, %4 : vector<2x32xf32>
    %6 = vector.extract_strided_slice %0 {offsets = [0, 96], sizes = [2, 32], strides = [1, 1]} : vector<2x256xf32> to vector<2x32xf32>
    %7 = arith.maximumf %5, %6 : vector<2x32xf32>
    %8 = vector.extract_strided_slice %0 {offsets = [0, 128], sizes = [2, 32], strides = [1, 1]} : vector<2x256xf32> to vector<2x32xf32>
    %9 = arith.maximumf %7, %8 : vector<2x32xf32>
    %10 = vector.extract_strided_slice %0 {offsets = [0, 160], sizes = [2, 32], strides = [1, 1]} : vector<2x256xf32> to vector<2x32xf32>
    %11 = arith.maximumf %9, %10 : vector<2x32xf32>
    %12 = vector.extract_strided_slice %0 {offsets = [0, 192], sizes = [2, 32], strides = [1, 1]} : vector<2x256xf32> to vector<2x32xf32>
    %13 = arith.maximumf %11, %12 : vector<2x32xf32>
    %14 = vector.extract_strided_slice %0 {offsets = [0, 224], sizes = [2, 32], strides = [1, 1]} : vector<2x256xf32> to vector<2x32xf32>
    %15 = arith.maximumf %13, %14 : vector<2x32xf32>
    %c0_1 = arith.constant 0 : index
    %c0_2 = arith.constant 0 : index
    %16 = vector.load %arg2[%c0_1, %c0_2] : memref<2x32xf32, #tpu.memory_space<vmem>>, vector<2x32xf32>
    tpu.vector_store %arg2[%c0_1, %c0_2], %15 {strides = array<i32>} : memref<2x32xf32, #tpu.memory_space<vmem>>, vector<2x32xf32>,
    return
  }
  func.func @transform_0(%arg0: i32) -> (i32, i32) {
    %c0_i32 = arith.constant 0 : i32
    %c0_i32_0 = arith.constant 0 : i32
    return %arg0, %c0_i32 : i32, i32
  }
  func.func @transform_1(%arg0: i32) -> (i32, i32) {
    %c0_i32 = arith.constant 0 : i32
    %c0_i32_0 = arith.constant 0 : i32
    return %arg0, %c0_i32 : i32, i32
  }
}

</mosaic_0001>

<llo_original>
// kernel: tpu_custom_call.1
$region0: #{tpu_custom_call.1}
  #allocation0 [shape = 'u32[]', space=smem, size = 0x4, offset = 0x4, fixed_abs, tag = 'smem constant byte address 0x4 - core index']
  #allocation1 [shape = 'u32[144,128]{1,0:T(1,128)}', space=vmem, size = 0x12000, scoped, tag = 'internal scratch']
  %s0 = inlined_call_operand.hbm [shape: f32[2,256], index: 0, kind: input, shape index: {}]
  %s1 = inlined_call_operand.hbm [shape: f32[2,32], index: 1, kind: output, shape index: {}]
  %s2 = sld [smem:[#allocation0]]
  $region18: #{tpu_custom_call.1} parent=0
    _
  %s4 = ssub.s32 1, %s2
  %s5 = scalar_select 0, %s4, %s2
  $region1: #{tpu_custom_call.1} parent=0
    #allocation2 [shape = 'u8[2048]{0}', space=vmem, size = 0x800, scoped, tag = 'input window, operand 0, single buffered']
    #allocation3 [shape = 's32[1]{0}', space=sflag, size = 0x4, scoped, tag = 'scoped memory for tpu_custom_call.1']
    #allocation4 [shape = 's32[1]{0}', space=sflag, size = 0x4, scoped, tag = 'scoped memory for tpu_custom_call.1']
    #allocation5 [shape = 'u8[1024]{0}', space=vmem, size = 0x400, scoped, tag = 'output window, operand 0, single buffered']
    %6 = vsyncpa [#allocation3], 0
    %7 = vsyncpa [#allocation4], 0
    // Predicated region
    $region2: #{tpu_custom_call.1} parent=1 // pred_check
      _
    $region3: #{tpu_custom_call.1} parent=1 // pred_check_branch
      %9 = sbr.rel (0) target = $region5
    $region4: #{tpu_custom_call.1} parent=1 // pred_region
      %s11 = ssub.s32 64, 64
      %12 = vsyncadd [#allocation3], %s11
      %s14 = sshll.u32 [#allocation2], 4
      %s15 = int_to_ptr.vmem [resolvable:$true] %s14
      %17 = dma.hbm_to_vmem [thread:$0]  %s0, 64, %s15, [#allocation3]
    $region5: #{tpu_custom_call.1} parent=1 // pred_fallthru
      _
    // Predicated region
    $region6: #{tpu_custom_call.1} parent=1 // pred_check
      _
    $region7: #{tpu_custom_call.1} parent=1 // pred_check_branch
      %19 = sbr.rel (0) target = $region9
    $region8: #{tpu_custom_call.1} parent=1 // pred_region
      %20 = dma.done [#allocation3], 64
    $region9: #{tpu_custom_call.1} parent=1 // pred_fallthru
      _
    %v21 = vld [vmem:[#allocation2] sm:$0xf]
    %23 = vrot.lane.b32.xlu0 %v21, 96
    %v24 = vpop.permute.xlu0 %23
    %v26 = vmax.f32 %v21, %v24
    %27 = vrot.lane.b32.xlu0 %v21, 64
    %v28 = vpop.permute.xlu0 %27
    %v30 = vmax.f32 %v26, %v28
    %31 = vrot.lane.b32.xlu0 %v21, 32
    %v32 = vpop.permute.xlu0 %31
    %v34 = vmax.f32 %v30, %v32
    %v35 = vrot.slane %v21, 2
    %v37 = vmax.f32 %v34, %v35
    %v38 = vrot.slane %v24, 2
    %v40 = vmax.f32 %v37, %v38
    %v41 = vrot.slane %v28, 2
    %v43 = vmax.f32 %v40, %v41
    %v44 = vrot.slane %v32, 2
    %v46 = vmax.f32 %v43, %v44
    %vm47 = vcmask 254976
    %48 = vst.msk [vmem:[#allocation5] sm:$0x3] %vm47, %v46
    // Predicated region
    $region10: #{tpu_custom_call.1} parent=1 // pred_check
      _
    $region11: #{tpu_custom_call.1} parent=1 // pred_check_branch
      %50 = sbr.rel (0) target = $region13
    $region12: #{tpu_custom_call.1} parent=1 // pred_region
      %s52 = ssub.s32 32, 32
      %53 = vsyncadd [#allocation4], %s52
      %s55 = sshll.u32 [#allocation5], 4
      %s56 = int_to_ptr.vmem [resolvable:$true] %s55
      %58 = dma.vmem_to_hbm [thread:$0]  %s56, 32, %s1, [#allocation4]
    $region13: #{tpu_custom_call.1} parent=1 // pred_fallthru
      _
    // Predicated region
    $region14: #{tpu_custom_call.1} parent=1 // pred_check
      _
    $region15: #{tpu_custom_call.1} parent=1 // pred_check_branch
      %60 = sbr.rel (0) target = $region17
    $region16: #{tpu_custom_call.1} parent=1 // pred_region
      %61 = dma.done [#allocation4], 32
    $region17: #{tpu_custom_call.1} parent=1 // pred_fallthru
      _
    %62 = vsyncpa [#allocation3], 1
    %63 = vsyncpa [#allocation4], 1

</llo_original>
